<compile_context>
chip_gen: v7x
topology: tpu7x:2x2x1
jax: 0.10.0
libtpu: 0.0.40
codegen_flags: <defaults>
</compile_context>

<pallas_src>
import jax
import jax.numpy as jnp
from jax import lax
from jax.experimental import pallas as pl
from jax.experimental.pallas import tpu as pltpu


def lvq_kernel(x_ref, w1t_ref, b1_ref, wft_ref, c0_ref, out_ref):
    # x tile (tm, D_in) -> (D_in, tm): the only in-kernel transpose (smallest
    # operand in the pipeline).
    x_t = x_ref[...].astype(jnp.float32).T                           # (D_in, tm)

    # Hidden layer, batch-on-lanes:  h_t[:, i] = relu(W1^T x_i + b1)
    h_t = jnp.dot(w1t_ref[...], x_t, preferred_element_type=jnp.float32)
    h_t = jnp.maximum(h_t + b1_ref[...], 0.0)                        # (H, tm) f32

    # Folded Linear2 + codebook cross term, f32 on the MXU:
    #   score[j, i] = -2 * z_i . v_j + ||v_j||^2   (||z_i||^2 dropped: const over j)
    score = jnp.dot(wft_ref[...], h_t,
                    preferred_element_type=jnp.float32) + c0_ref[...]  # (n_bins, tm)

    # First-occurrence argmin over SUBLANES -> lane-dense (1, tm) int32 row.
    n_bins = score.shape[0]
    min_s = jnp.min(score, axis=0, keepdims=True)                    # (1, tm)
    j_iota = lax.broadcasted_iota(jnp.int32, score.shape, 0)
    cand = jnp.where(score <= min_s, j_iota, n_bins)
    out_ref[...] = jnp.min(cand, axis=0, keepdims=True)              # (1, tm)


def _pick_tm(m, target_tm=512, min_steps=4):
    """Row-tile size.

    Multi-tile path keeps tm a multiple of 128 (unmasked lane-dense int32
    stores) and aims for >= `min_steps` grid steps so the x DMA pipelines and
    both v7x TensorCores get >= 2 steps each.  Small problems use a single
    full-size tile (block dims equal to the array dims satisfy the (8, 128)
    BlockSpec rule).
    """
    if m <= 256:
        return m
    tm = target_tm
    while tm > 128 and pl.cdiv(m, tm) < min_steps:
        tm //= 2                      # stays a multiple of 128
    return tm


def learnable_vector_quantization(x, w1, b1, w2, b2, vectors, *, tm=None):
    """x: (..., D_in).  Returns int32 codebook indices of shape x.shape[:-1]."""
    lead_shape = x.shape[:-1]
    d_in = x.shape[-1]
    hdim = w1.shape[1]
    n_bins = vectors.shape[0]

    xf = x.reshape(-1, d_in)          # view only: no cast, no pad, no transpose
    m = xf.shape[0]

    # --- tiny wrapper-side parameter prep (f32; all <= n_bins x H elements) ---
    w1t = w1.astype(jnp.float32).T                                   # (H, D_in)
    b1c = b1.astype(jnp.float32).reshape(hdim, 1)                    # (H, 1)
    v32 = vectors.astype(jnp.float32)
    w2f = w2.astype(jnp.float32)
    b2f = b2.astype(jnp.float32)
    wft = -2.0 * (v32 @ w2f.T)                                       # (n_bins, H) = (-2 W2 V^T)^T
    c0c = (jnp.sum(v32 * v32, axis=-1) - 2.0 * (v32 @ b2f)).reshape(n_bins, 1)

    if tm is None:
        tm = _pick_tm(m)
    num_tiles = pl.cdiv(m, tm)
    m_out = num_tiles * tm            # last x tile may be ragged; no jnp.pad of x

    def const_spec(shape):
        # grid-invariant operand: constant block index -> stays resident in VMEM
        return pl.BlockSpec(shape, lambda i: (0, 0))

    grid_spec = pltpu.PrefetchScalarGridSpec(
        num_scalar_prefetch=0,
        grid=(num_tiles,),
        in_specs=[
            pl.BlockSpec((tm, d_in), lambda i: (i, 0)),   # streamed x row-tile
            const_spec((hdim, d_in)),                     # W1^T    (resident)
            const_spec((hdim, 1)),                        # b1      (column)
            const_spec((n_bins, hdim)),                   # Wfold^T (resident)
            const_spec((n_bins, 1)),                      # c0      (column)
        ],
        # lane-dense int32 output: one (1, tm) row per grid step, never masked
        out_specs=pl.BlockSpec((1, tm), lambda i: (0, i)),
    )

    out = pl.pallas_call(
        lvq_kernel,
        out_shape=jax.ShapeDtypeStruct((1, m_out), jnp.int32),
        grid_spec=grid_spec,
        compiler_params=pltpu.CompilerParams(
            dimension_semantics=("parallel",),
            vmem_limit_bytes=16 * 1024 * 1024),
    )(xf, w1t, b1c, wft, c0c)

    return out.reshape(-1)[:m].reshape(lead_shape)


if __name__ == "__main__":
    key = jax.random.PRNGKey(0)
    k_x, k_w1, k_b1, k_w2, k_b2, k_cb = jax.random.split(key, 6)

    # small shapes: batch=2, seq=32, feature D_in=32, net hidden H=64,
    # quantization_dim Q=16, n_bins=128
    B, S, D_IN, H, Q, N_BINS = 2, 32, 32, 64, 16, 128

    x = jax.random.normal(k_x, (B, S, D_IN), dtype=jnp.float32)

    # deterministic parameter init for the synthetic `net` (Linear-ReLU-Linear)
    w1 = jax.random.normal(k_w1, (D_IN, H), jnp.float32) * (1.0 / jnp.sqrt(D_IN))
    b1 = jax.random.normal(k_b1, (H,), jnp.float32) * 0.01
    w2 = jax.random.normal(k_w2, (H, Q), jnp.float32) * (1.0 / jnp.sqrt(H))
    b2 = jax.random.normal(k_b2, (Q,), jnp.float32) * 0.01

    # codebook init matches torch: uniform_(-1/n_bins, 1/n_bins)
    vectors = jax.random.uniform(k_cb, (N_BINS, Q), jnp.float32,
                                 minval=-1.0 / N_BINS, maxval=1.0 / N_BINS)

    idx = learnable_vector_quantization(x, w1, b1, w2, b2, vectors)
    idx = jax.block_until_ready(idx)
    assert idx.shape == (B, S)
    assert idx.dtype == jnp.int32

    # reference in plain JAX f32 (same math as torch.cdist + torch.min)
    z_ref = jnp.maximum(x.reshape(-1, D_IN) @ w1 + b1, 0.0) @ w2 + b2
    d_ref = jnp.sum((z_ref[:, None, :] - vectors[None, :, :]) ** 2, axis=-1)
    idx_ref = jnp.argmin(d_ref, axis=-1)

    # all-f32 kernel: expect exact agreement except for genuine floating-point
    # near-ties (the folded score differs from the expanded ||z - v||^2 by
    # rounding only), so the tolerance is tight.
    idx_flat = idx.reshape(-1)
    rows = jnp.arange(d_ref.shape[0])
    d_pick = d_ref[rows, idx_flat]
    d_best = d_ref[rows, idx_ref]
    ok = (idx_flat == idx_ref) | (d_pick <= d_best + 1e-4 + 1e-4 * d_best)

    assert bool(jnp.all((idx_flat >= 0) & (idx_flat < N_BINS)))
    assert bool(jnp.all(ok)), "kernel indices deviate beyond near-tie tolerance"

    print("KERNEL_OK")
</pallas_src>

<mosaic_0001>
module attributes {stable_mosaic.version = 11 : i64} {
  func.func @lvq_kernel(%arg0: i32, %arg1: memref<64x32xf32, #tpu.memory_space<vmem>>, %arg2: memref<64x32xf32, #tpu.memory_space<vmem>>, %arg3: memref<64x1xf32, #tpu.memory_space<vmem>>, %arg4: memref<128x64xf32, #tpu.memory_space<vmem>>, %arg5: memref<128x1xf32, #tpu.memory_space<vmem>>, %arg6: memref<1x64xi32, #tpu.memory_space<vmem>>) attributes {dimension_semantics = [#tpu.dimension_semantics<parallel>], iteration_bounds = array<i64: 1>, scalar_prefetch = 0 : i64, scratch_operands = 0 : i64, tpu.core_type = #tpu.core_type<tc>, window_params = [{transform_indices = @transform_0, window_bounds = array<i64: 64, 32>}, {pipeline_mode = #tpu.pipeline_mode<synchronous>, transform_indices = @transform_1, window_bounds = array<i64: 64, 32>}, {pipeline_mode = #tpu.pipeline_mode<synchronous>, transform_indices = @transform_2, window_bounds = array<i64: 64, 1>}, {pipeline_mode = #tpu.pipeline_mode<synchronous>, transform_indices = @transform_3, window_bounds = array<i64: 128, 64>}, {pipeline_mode = #tpu.pipeline_mode<synchronous>, transform_indices = @transform_4, window_bounds = array<i64: 128, 1>}, {transform_indices = @transform_5, window_bounds = array<i64: 1, 64>}]} {
    %c0 = arith.constant 0 : index
    %c0_0 = arith.constant 0 : index
    %0 = vector.load %arg1[%c0, %c0_0] : memref<64x32xf32, #tpu.memory_space<vmem>>, vector<64x32xf32>
    %1 = tpu.transpose %0, [1, 0] : vector<64x32xf32> -> vector<32x64xf32>
    %c0_1 = arith.constant 0 : index
    %c0_2 = arith.constant 0 : index
    %2 = vector.load %arg2[%c0_1, %c0_2] : memref<64x32xf32, #tpu.memory_space<vmem>>, vector<64x32xf32>
    %cst = arith.constant dense<0.000000e+00> : vector<64x64xf32>
    %3 = tpu.matmul %2, %1, %cst {dimension_numbers = #tpu.dot_dimension_numbers<[1], [0], [0], [1], [0, 0, 1, 1], [], []>} : vector<64x32xf32>, vector<32x64xf32>, vector<64x64xf32> -> vector<64x64xf32>
    %c0_3 = arith.constant 0 : index
    %c0_4 = arith.constant 0 : index
    %4 = vector.load %arg3[%c0_3, %c0_4] : memref<64x1xf32, #tpu.memory_space<vmem>>, vector<64x1xf32>
    %5 = vector.broadcast %4 : vector<64x1xf32> to vector<64x64xf32>
    %6 = arith.addf %3, %5 : vector<64x64xf32>
    %cst_5 = arith.constant 0.000000e+00 : f32
    %7 = vector.broadcast %cst_5 : f32 to vector<64x64xf32>
    %8 = arith.maximumf %6, %7 : vector<64x64xf32>
    %c0_6 = arith.constant 0 : index
    %c0_7 = arith.constant 0 : index
    %9 = vector.load %arg4[%c0_6, %c0_7] : memref<128x64xf32, #tpu.memory_space<vmem>>, vector<128x64xf32>
    %cst_8 = arith.constant dense<0.000000e+00> : vector<128x64xf32>
    %10 = tpu.matmul %9, %8, %cst_8 {dimension_numbers = #tpu.dot_dimension_numbers<[1], [0], [0], [1], [0, 0, 1, 1], [], []>} : vector<128x64xf32>, vector<64x64xf32>, vector<128x64xf32> -> vector<128x64xf32>
    %c0_9 = arith.constant 0 : index
    %c0_10 = arith.constant 0 : index
    %11 = vector.load %arg5[%c0_9, %c0_10] : memref<128x1xf32, #tpu.memory_space<vmem>>, vector<128x1xf32>
    %12 = vector.broadcast %11 : vector<128x1xf32> to vector<128x64xf32>
    %13 = arith.addf %10, %12 : vector<128x64xf32>
    %cst_11 = arith.constant dense<0x7F800000> : vector<64xf32>
    %14 = vector.multi_reduction <minimumf>, %13, %cst_11 [0] : vector<128x64xf32> to vector<64xf32>
    %15 = vector.shape_cast %14 : vector<64xf32> to vector<1x64xf32>
    %16 = tpu.iota {dimensions = array<i32: 0>} : vector<128x64xi32>
    %17 = vector.broadcast %15 : vector<1x64xf32> to vector<128x64xf32>
    %18 = arith.cmpf ole, %13, %17 : vector<128x64xf32>
    %c128_i32 = arith.constant 128 : i32
    %19 = vector.broadcast %c128_i32 : i32 to vector<128x64xi32>
    %20 = arith.select %18, %16, %19 : vector<128x64xi1>, vector<128x64xi32>
    %cst_12 = arith.constant dense<2147483647> : vector<64xi32>
    %21 = vector.multi_reduction <minsi>, %20, %cst_12 [0] : vector<128x64xi32> to vector<64xi32>
    %22 = vector.shape_cast %21 : vector<64xi32> to vector<1x64xi32>
    %c0_13 = arith.constant 0 : index
    %c0_14 = arith.constant 0 : index
    %23 = vector.load %arg6[%c0_13, %c0_14] : memref<1x64xi32, #tpu.memory_space<vmem>>, vector<1x64xi32>
    tpu.vector_store %arg6[%c0_13, %c0_14], %22 {strides = array<i32>} : memref<1x64xi32, #tpu.memory_space<vmem>>, vector<1x64xi32>,
    return
  }
  func.func @transform_0(%arg0: i32) -> (i32, i32) {
    %c0_i32 = arith.constant 0 : i32
    %c0_i32_0 = arith.constant 0 : i32
    return %arg0, %c0_i32 : i32, i32
  }
  func.func @transform_1(%arg0: i32) -> (i32, i32) {
    %c0_i32 = arith.constant 0 : i32
    %c0_i32_0 = arith.constant 0 : i32
    %c0_i32_1 = arith.constant 0 : i32
    return %c0_i32, %c0_i32_0 : i32, i32
  }
  func.func @transform_2(%arg0: i32) -> (i32, i32) {
    %c0_i32 = arith.constant 0 : i32
    %c0_i32_0 = arith.constant 0 : i32
    %c0_i32_1 = arith.constant 0 : i32
    return %c0_i32, %c0_i32_0 : i32, i32
  }
  func.func @transform_3(%arg0: i32) -> (i32, i32) {
    %c0_i32 = arith.constant 0 : i32
    %c0_i32_0 = arith.constant 0 : i32
    %c0_i32_1 = arith.constant 0 : i32
    return %c0_i32, %c0_i32_0 : i32, i32
  }
  func.func @transform_4(%arg0: i32) -> (i32, i32) {
    %c0_i32 = arith.constant 0 : i32
    %c0_i32_0 = arith.constant 0 : i32
    %c0_i32_1 = arith.constant 0 : i32
    return %c0_i32, %c0_i32_0 : i32, i32
  }
  func.func @transform_5(%arg0: i32) -> (i32, i32) {
    %c0_i32 = arith.constant 0 : i32
    %c0_i32_0 = arith.constant 0 : i32
    return %c0_i32, %arg0 : i32, i32
  }
}

</mosaic_0001>

<llo_original>
// kernel: tpu_custom_call.1
$region0: #{tpu_custom_call.1}
  #allocation0 [shape = 'u32[]', space=smem, size = 0x4, offset = 0x4, fixed_abs, tag = 'smem constant byte address 0x4 - core index']
  #allocation1 [shape = 'u32[144,128]{1,0:T(1,128)}', space=vmem, size = 0x12000, scoped, tag = 'internal scratch']
  %s0 = inlined_call_operand.vmem [shape: f32[64,32], index: 0, kind: input, shape index: {}]
  %s1 = inlined_call_operand.vmem [shape: f32[64,32], index: 1, kind: input, shape index: {}]
  %s2 = inlined_call_operand.vmem [shape: f32[64,1], index: 2, kind: input, shape index: {}]
  %s3 = inlined_call_operand.vmem [shape: f32[128,64], index: 3, kind: input, shape index: {}]
  %s4 = inlined_call_operand.vmem [shape: f32[128,1], index: 4, kind: input, shape index: {}]
  %s5 = inlined_call_operand.hbm [shape: s32[1,64], index: 5, kind: output, shape index: {}]
  %s6 = sld [smem:[#allocation0]]
  $region30: #{tpu_custom_call.1} parent=0
    _
  %s8 = ssub.s32 1, %s6
  %s9 = scalar_select 0, %s8, %s6
  $region1: #{tpu_custom_call.1} parent=0
    #allocation2 [shape = 'u8[512]{0}', space=vmem, size = 0x400, scoped, tag = 'output window, operand 0, single buffered']
    #allocation3 [shape = 's32[1]{0}', space=sflag, size = 0x4, scoped, tag = 'scoped memory for tpu_custom_call.1']
    %10 = vsyncpa [#allocation3], 0
    // Predicated region
    $region2: #{tpu_custom_call.1} parent=1 // pred_check
      _
    $region3: #{tpu_custom_call.1} parent=1 // pred_check_branch
      %12 = sbr.rel (0) target = $region5
    $region4: #{tpu_custom_call.1} parent=1 // pred_region
      _
    $region5: #{tpu_custom_call.1} parent=1 // pred_fallthru
      _
    // Predicated region
    $region6: #{tpu_custom_call.1} parent=1 // pred_check
      _
    $region7: #{tpu_custom_call.1} parent=1 // pred_check_branch
      %14 = sbr.rel (0) target = $region9
    $region8: #{tpu_custom_call.1} parent=1 // pred_region
      _
    $region9: #{tpu_custom_call.1} parent=1 // pred_fallthru
      _
    // Predicated region
    $region10: #{tpu_custom_call.1} parent=1 // pred_check
      _
    $region11: #{tpu_custom_call.1} parent=1 // pred_check_branch
      %16 = sbr.rel (0) target = $region13
    $region12: #{tpu_custom_call.1} parent=1 // pred_region
      _
    $region13: #{tpu_custom_call.1} parent=1 // pred_fallthru
      _
    // Predicated region
    $region14: #{tpu_custom_call.1} parent=1 // pred_check
      _
    $region15: #{tpu_custom_call.1} parent=1 // pred_check_branch
      %18 = sbr.rel (0) target = $region17
    $region16: #{tpu_custom_call.1} parent=1 // pred_region
      _
    $region17: #{tpu_custom_call.1} parent=1 // pred_fallthru
      _
    // Predicated region
    $region18: #{tpu_custom_call.1} parent=1 // pred_check
      _
    $region19: #{tpu_custom_call.1} parent=1 // pred_check_branch
      %20 = sbr.rel (0) target = $region21
    $region20: #{tpu_custom_call.1} parent=1 // pred_region
      _
    $region21: #{tpu_custom_call.1} parent=1 // pred_fallthru
      _
    %v21 = vld [vmem:[%s0] sm:$0xff]
    %v22 = vld [vmem:[%s0 + $0x8] sm:$0xff]
    %v23 = vld [vmem:[%s0 + $0x10] sm:$0xff]
    %v24 = vld [vmem:[%s0 + $0x18] sm:$0xff]
    %v25 = vld [vmem:[%s0 + $0x20] sm:$0xff]
    %v26 = vld [vmem:[%s0 + $0x28] sm:$0xff]
    %v27 = vld [vmem:[%s0 + $0x30] sm:$0xff]
    %v28 = vld [vmem:[%s0 + $0x38] sm:$0xff]
    %v29 = vld [vmem:[%s1] sm:$0xff]
    %v30 = vld [vmem:[%s1 + $0x8] sm:$0xff]
    %v31 = vld [vmem:[%s1 + $0x10] sm:$0xff]
    %v32 = vld [vmem:[%s1 + $0x18] sm:$0xff]
    %v33 = vld [vmem:[%s1 + $0x20] sm:$0xff]
    %v34 = vld [vmem:[%s1 + $0x28] sm:$0xff]
    %v35 = vld [vmem:[%s1 + $0x30] sm:$0xff]
    %v36 = vld [vmem:[%s1 + $0x38] sm:$0xff]
    %v37 = vld [vmem:[%s2] sm:$0xff]
    %v38 = vld [vmem:[%s2 + $0x8] sm:$0xff]
    %v39 = vld [vmem:[%s2 + $0x10] sm:$0xff]
    %v40 = vld [vmem:[%s2 + $0x18] sm:$0xff]
    %v41 = vld [vmem:[%s2 + $0x20] sm:$0xff]
    %v42 = vld [vmem:[%s2 + $0x28] sm:$0xff]
    %v43 = vld [vmem:[%s2 + $0x30] sm:$0xff]
    %v44 = vld [vmem:[%s2 + $0x38] sm:$0xff]
    %46 = vset.pattern.permute.xlu0 0
    %47 = vperm.xlu0 %46, %v37
    %v48 = vpop.permute.xlu0 %47
    %51 = vset.pattern.permute.xlu0 0
    %52 = vperm.xlu0 %51, %v38
    %v53 = vpop.permute.xlu0 %52
    %56 = vset.pattern.permute.xlu0 0
    %57 = vperm.xlu0 %56, %v39
    %v58 = vpop.permute.xlu0 %57
    %61 = vset.pattern.permute.xlu0 0
    %62 = vperm.xlu0 %61, %v40
    %v63 = vpop.permute.xlu0 %62
    %66 = vset.pattern.permute.xlu0 0
    %67 = vperm.xlu0 %66, %v41
    %v68 = vpop.permute.xlu0 %67
    %71 = vset.pattern.permute.xlu0 0
    %72 = vperm.xlu0 %71, %v42
    %v73 = vpop.permute.xlu0 %72
    %76 = vset.pattern.permute.xlu0 0
    %77 = vperm.xlu0 %76, %v43
    %v78 = vpop.permute.xlu0 %77
    %81 = vset.pattern.permute.xlu0 0
    %82 = vperm.xlu0 %81, %v44
    %v83 = vpop.permute.xlu0 %82
    %vm85 = vcmask 261120
    %v87 = vsel %vm85, %v29, 0
    %v90 = vsel %vm85, %v30, 0
    %v93 = vsel %vm85, %v31, 0
    %v96 = vsel %vm85, %v32, 0
    %v99 = vsel %vm85, %v33, 0
    %v102 = vsel %vm85, %v34, 0
    %v105 = vsel %vm85, %v35, 0
    %v108 = vsel %vm85, %v36, 0
    %v111 = vsel %vm85, %v21, 0
    %v114 = vsel %vm85, %v22, 0
    %v117 = vsel %vm85, %v23, 0
    %v120 = vsel %vm85, %v24, 0
    %v123 = vsel %vm85, %v25, 0
    %v126 = vsel %vm85, %v26, 0
    %v129 = vsel %vm85, %v27, 0
    %v132 = vsel %vm85, %v28, 0
    %134 = vmatprep.subr.mxu0 0.0
    %135 = vmatpush1.xpose.msra.mxu0 %v111
    %136 = vmatprep.subr.mxu0 0.0
    %137 = vmatpush1.xpose.msra.mxu0 %v114
    %138 = vmatprep.subr.mxu0 0.0
    %139 = vmatpush1.xpose.msra.mxu0 %v117
    %140 = vmatprep.subr.mxu0 0.0
    %141 = vmatpush1.xpose.msra.mxu0 %v120
    %142 = vmatprep.subr.mxu0 0.0
    %143 = vmatpush1.xpose.msra.mxu0 %v123
    %144 = vmatprep.subr.mxu0 0.0
    %145 = vmatpush1.xpose.msra.mxu0 %v126
    %146 = vmatprep.subr.mxu0 0.0
    %147 = vmatpush1.xpose.msra.mxu0 %v129
    %148 = vmatprep.subr.mxu0 0.0
    %149 = vmatpush1.xpose.msra.mxu0 %v132
    %150 = vmatprep.subr.mxu0 0.0
    %151 = vmatpush1.xpose.msra.mxu0 0.0
    %152 = vmatprep.subr.mxu0 0.0
    %153 = vmatpush1.xpose.msra.mxu0 0.0
    %154 = vmatprep.subr.mxu0 0.0
    %155 = vmatpush1.xpose.msra.mxu0 0.0
    %156 = vmatprep.subr.mxu0 0.0
    %157 = vmatpush1.xpose.msra.mxu0 0.0
    %158 = vmatprep.subr.mxu0 0.0
    %159 = vmatpush1.xpose.msra.mxu0 0.0
    %160 = vmatprep.subr.mxu0 0.0
    %161 = vmatpush1.xpose.msra.mxu0 0.0
    %162 = vmatprep.subr.mxu0 0.0
    %163 = vmatpush1.xpose.msra.mxu0 0.0
    %164 = vmatprep.subr.mxu0 0.0
    %165 = vmatpush1.xpose.msra.mxu0 0.0
    %166 = vmatprep.subr.mxu0 0.0
    %167 = vmatpush1.xpose.msra.mxu0 0.0
    %168 = vmatprep.subr.mxu0 0.0
    %169 = vmatpush1.xpose.msra.mxu0 0.0
    %170 = vmatprep.subr.mxu0 0.0
    %171 = vmatpush1.xpose.msra.mxu0 0.0
    %172 = vmatprep.subr.mxu0 0.0
    %173 = vmatpush1.xpose.msra.mxu0 0.0
    %174 = vmatprep.subr.mxu0 0.0
    %175 = vmatpush1.xpose.msra.mxu0 0.0
    %176 = vmatprep.subr.mxu0 0.0
    %177 = vmatpush1.xpose.msra.mxu0 0.0
    %178 = vmatprep.subr.mxu0 0.0
    %179 = vmatpush1.xpose.msra.mxu0 0.0
    %180 = vmatprep.subr.mxu0 0.0
    %181 = vmatpush1.xpose.msra.mxu0 0.0
    %182 = vmatprep.subr.mxu0 0.0
    %183 = vmatpush1.xpose.msra.mxu0 0.0
    %184 = vmatprep.subr.mxu0 0.0
    %185 = vmatpush1.xpose.msra.mxu0 0.0
    %186 = vmatprep.subr.mxu0 0.0
    %187 = vmatpush1.xpose.msra.mxu0 0.0
    %188 = vmatprep.subr.mxu0 0.0
    %189 = vmatpush1.xpose.msra.mxu0 0.0
    %190 = vmatprep.subr.mxu0 0.0
    %191 = vmatpush1.xpose.msra.mxu0 0.0
    %192 = vmatprep.subr.mxu0 0.0
    %193 = vmatpush1.xpose.msra.mxu0 0.0
    %194 = vmatprep.subr.mxu0 0.0
    %195 = vmatpush1.xpose.msra.mxu0 0.0
    %196 = vmatprep.subr.mxu0 0.0
    %197 = vmatpush1.xpose.msra.mxu0 0.0
    %198 = vmatprep.mubr.f32.mxu0 0.0
    %199 = vmatmul.mubr.f32.gmra.mrb[0].mxu0 %v87
    %v200 = vpop.f32.mrb[0].mxu0
    %v201 = vadd.f32 %v48, %v200
    %v202 = vpop.f32.mrb[0].mxu0
    %203 = vmatprep.mubr.f32.mxu0 0.0
    %204 = vmatmul.mubr.f32.gmra.mrb[0].mxu0 %v90
    %v205 = vpop.f32.mrb[0].mxu0
    %v206 = vadd.f32 %v53, %v205
    %v207 = vpop.f32.mrb[0].mxu0
    %208 = vmatprep.mubr.f32.mxu0 0.0
    %209 = vmatmul.mubr.f32.gmra.mrb[0].mxu0 %v93
    %v210 = vpop.f32.mrb[0].mxu0
    %v211 = vadd.f32 %v58, %v210
    %v212 = vpop.f32.mrb[0].mxu0
    %213 = vmatprep.mubr.f32.mxu0 0.0
    %214 = vmatmul.mubr.f32.gmra.mrb[0].mxu0 %v96
    %v215 = vpop.f32.mrb[0].mxu0
    %v216 = vadd.f32 %v63, %v215
    %v217 = vpop.f32.mrb[0].mxu0
    %218 = vmatprep.mubr.f32.mxu0 0.0
    %219 = vmatmul.mubr.f32.gmra.mrb[0].mxu0 %v99
    %v220 = vpop.f32.mrb[0].mxu0
    %v221 = vadd.f32 %v68, %v220
    %v222 = vpop.f32.mrb[0].mxu0
    %223 = vmatprep.mubr.f32.mxu0 0.0
    %224 = vmatmul.mubr.f32.gmra.mrb[0].mxu0 %v102
    %v225 = vpop.f32.mrb[0].mxu0
    %v226 = vadd.f32 %v73, %v225
    %v227 = vpop.f32.mrb[0].mxu0
    %228 = vmatprep.mubr.f32.mxu0 0.0
    %229 = vmatmul.mubr.f32.gmra.mrb[0].mxu0 %v105
    %v230 = vpop.f32.mrb[0].mxu0
    %v231 = vadd.f32 %v78, %v230
    %v232 = vpop.f32.mrb[0].mxu0
    %233 = vmatprep.mubr.f32.mxu0 0.0
    %234 = vmatmul.mubr.f32.gmra.mrb[0].mxu0 %v108
    %v235 = vpop.f32.mrb[0].mxu0
    %v236 = vadd.f32 %v83, %v235
    %v237 = vpop.f32.mrb[0].mxu0
    %238 = vdwg.mxu0
    %v239 = vmax.f32 %v201, 0.0
    %v240 = vmax.f32 %v206, 0.0
    %v241 = vmax.f32 %v211, 0.0
    %v242 = vmax.f32 %v216, 0.0
    %v243 = vmax.f32 %v221, 0.0
    %v244 = vmax.f32 %v226, 0.0
    %v245 = vmax.f32 %v231, 0.0
    %v246 = vmax.f32 %v236, 0.0
    %v247 = vld [vmem:[%s3] sm:$0xff]
    %v248 = vld [vmem:[%s3 + $0x8] sm:$0xff]
    %v249 = vld [vmem:[%s3 + $0x10] sm:$0xff]
    %v250 = vld [vmem:[%s3 + $0x18] sm:$0xff]
    %v251 = vld [vmem:[%s3 + $0x20] sm:$0xff]
    %v252 = vld [vmem:[%s3 + $0x28] sm:$0xff]
    %v253 = vld [vmem:[%s3 + $0x30] sm:$0xff]
    %v254 = vld [vmem:[%s3 + $0x38] sm:$0xff]
    %v255 = vld [vmem:[%s3 + $0x40] sm:$0xff]
    %v256 = vld [vmem:[%s3 + $0x48] sm:$0xff]
    %v257 = vld [vmem:[%s3 + $0x50] sm:$0xff]
    %v258 = vld [vmem:[%s3 + $0x58] sm:$0xff]
    %v259 = vld [vmem:[%s3 + $0x60] sm:$0xff]
    %v260 = vld [vmem:[%s3 + $0x68] sm:$0xff]
    %v261 = vld [vmem:[%s3 + $0x70] sm:$0xff]
    %v262 = vld [vmem:[%s3 + $0x78] sm:$0xff]
    %v263 = vld [vmem:[%s4] sm:$0xff]
    %v264 = vld [vmem:[%s4 + $0x8] sm:$0xff]
    %v265 = vld [vmem:[%s4 + $0x10] sm:$0xff]
    %v266 = vld [vmem:[%s4 + $0x18] sm:$0xff]
    %v267 = vld [vmem:[%s4 + $0x20] sm:$0xff]
    %v268 = vld [vmem:[%s4 + $0x28] sm:$0xff]
    %v269 = vld [vmem:[%s4 + $0x30] sm:$0xff]
    %v270 = vld [vmem:[%s4 + $0x38] sm:$0xff]
    %v271 = vld [vmem:[%s4 + $0x40] sm:$0xff]
    %v272 = vld [vmem:[%s4 + $0x48] sm:$0xff]
    %v273 = vld [vmem:[%s4 + $0x50] sm:$0xff]
    %v274 = vld [vmem:[%s4 + $0x58] sm:$0xff]
    %v275 = vld [vmem:[%s4 + $0x60] sm:$0xff]
    %v276 = vld [vmem:[%s4 + $0x68] sm:$0xff]
    %v277 = vld [vmem:[%s4 + $0x70] sm:$0xff]
    %v278 = vld [vmem:[%s4 + $0x78] sm:$0xff]
    %280 = vset.pattern.permute.xlu0 0
    %281 = vperm.xlu0 %280, %v263
    %v282 = vpop.permute.xlu0 %281
    %285 = vset.pattern.permute.xlu0 0
    %286 = vperm.xlu0 %285, %v264
    %v287 = vpop.permute.xlu0 %286
    %290 = vset.pattern.permute.xlu0 0
    %291 = vperm.xlu0 %290, %v265
    %v292 = vpop.permute.xlu0 %291
    %295 = vset.pattern.permute.xlu0 0
    %296 = vperm.xlu0 %295, %v266
    %v297 = vpop.permute.xlu0 %296
    %300 = vset.pattern.permute.xlu0 0
    %301 = vperm.xlu0 %300, %v267
    %v302 = vpop.permute.xlu0 %301
    %305 = vset.pattern.permute.xlu0 0
    %306 = vperm.xlu0 %305, %v268
    %v307 = vpop.permute.xlu0 %306
    %310 = vset.pattern.permute.xlu0 0
    %311 = vperm.xlu0 %310, %v269
    %v312 = vpop.permute.xlu0 %311
    %315 = vset.pattern.permute.xlu0 0
    %316 = vperm.xlu0 %315, %v270
    %v317 = vpop.permute.xlu0 %316
    %320 = vset.pattern.permute.xlu0 0
    %321 = vperm.xlu0 %320, %v271
    %v322 = vpop.permute.xlu0 %321
    %325 = vset.pattern.permute.xlu0 0
    %326 = vperm.xlu0 %325, %v272
    %v327 = vpop.permute.xlu0 %326
    %330 = vset.pattern.permute.xlu0 0
    %331 = vperm.xlu0 %330, %v273
    %v332 = vpop.permute.xlu0 %331
    %335 = vset.pattern.permute.xlu0 0
    %336 = vperm.xlu0 %335, %v274
    %v337 = vpop.permute.xlu0 %336
    %340 = vset.pattern.permute.xlu0 0
    %341 = vperm.xlu0 %340, %v275
    %v342 = vpop.permute.xlu0 %341
    %345 = vset.pattern.permute.xlu0 0
    %346 = vperm.xlu0 %345, %v276
    %v347 = vpop.permute.xlu0 %346
    %350 = vset.pattern.permute.xlu0 0
    %351 = vperm.xlu0 %350, %v277
    %v352 = vpop.permute.xlu0 %351
    %355 = vset.pattern.permute.xlu0 0
    %356 = vperm.xlu0 %355, %v278
    %v357 = vpop.permute.xlu0 %356
    %vm359 = vcmask 523264
    %v361 = vsel %vm359, %v247, 0
    %v364 = vsel %vm359, %v248, 0
    %v367 = vsel %vm359, %v249, 0
    %v370 = vsel %vm359, %v250, 0
    %v373 = vsel %vm359, %v251, 0
    %v376 = vsel %vm359, %v252, 0
    %v379 = vsel %vm359, %v253, 0
    %v382 = vsel %vm359, %v254, 0
    %v385 = vsel %vm359, %v255, 0
    %v388 = vsel %vm359, %v256, 0
    %v391 = vsel %vm359, %v257, 0
    %v394 = vsel %vm359, %v258, 0
    %v397 = vsel %vm359, %v259, 0
    %v400 = vsel %vm359, %v260, 0
    %v403 = vsel %vm359, %v261, 0
    %v406 = vsel %vm359, %v262, 0
    %408 = vmatprep.subr.mxu0 0.0
    %409 = vmatpush1.msra.mxu0 %v239
    %410 = vmatprep.subr.mxu0 0.0
    %411 = vmatpush1.msra.mxu0 %v240
    %412 = vmatprep.subr.mxu0 0.0
    %413 = vmatpush1.msra.mxu0 %v241
    %414 = vmatprep.subr.mxu0 0.0
    %415 = vmatpush1.msra.mxu0 %v242
    %416 = vmatprep.subr.mxu0 0.0
    %417 = vmatpush1.msra.mxu0 %v243
    %418 = vmatprep.subr.mxu0 0.0
    %419 = vmatpush1.msra.mxu0 %v244
    %420 = vmatprep.subr.mxu0 0.0
    %421 = vmatpush1.msra.mxu0 %v245
    %422 = vmatprep.subr.mxu0 0.0
    %423 = vmatpush1.msra.mxu0 %v246
    %424 = vmatprep.subr.mxu0 0.0
    %425 = vmatpush1.msra.mxu0 0.0
    %426 = vmatprep.subr.mxu0 0.0
    %427 = vmatpush1.msra.mxu0 0.0
    %428 = vmatprep.subr.mxu0 0.0
    %429 = vmatpush1.msra.mxu0 0.0
    %430 = vmatprep.subr.mxu0 0.0
    %431 = vmatpush1.msra.mxu0 0.0
    %432 = vmatprep.subr.mxu0 0.0
    %433 = vmatpush1.msra.mxu0 0.0
    %434 = vmatprep.subr.mxu0 0.0
    %435 = vmatpush1.msra.mxu0 0.0
    %436 = vmatprep.subr.mxu0 0.0
    %437 = vmatpush1.msra.mxu0 0.0
    %438 = vmatprep.subr.mxu0 0.0
    %439 = vmatpush1.msra.mxu0 0.0
    %440 = vmatprep.subr.mxu0 0.0
    %441 = vmatpush1.msra.mxu0 0.0
    %442 = vmatprep.subr.mxu0 0.0
    %443 = vmatpush1.msra.mxu0 0.0
    %444 = vmatprep.subr.mxu0 0.0
    %445 = vmatpush1.msra.mxu0 0.0
    %446 = vmatprep.subr.mxu0 0.0
    %447 = vmatpush1.msra.mxu0 0.0
    %448 = vmatprep.subr.mxu0 0.0
    %449 = vmatpush1.msra.mxu0 0.0
    %450 = vmatprep.subr.mxu0 0.0
    %451 = vmatpush1.msra.mxu0 0.0
    %452 = vmatprep.subr.mxu0 0.0
    %453 = vmatpush1.msra.mxu0 0.0
    %454 = vmatprep.subr.mxu0 0.0
    %455 = vmatpush1.msra.mxu0 0.0
    %456 = vmatprep.subr.mxu0 0.0
    %457 = vmatpush1.msra.mxu0 0.0
    %458 = vmatprep.subr.mxu0 0.0
    %459 = vmatpush1.msra.mxu0 0.0
    %460 = vmatprep.subr.mxu0 0.0
    %461 = vmatpush1.msra.mxu0 0.0
    %462 = vmatprep.subr.mxu0 0.0
    %463 = vmatpush1.msra.mxu0 0.0
    %464 = vmatprep.subr.mxu0 0.0
    %465 = vmatpush1.msra.mxu0 0.0
    %466 = vmatprep.subr.mxu0 0.0
    %467 = vmatpush1.msra.mxu0 0.0
    %468 = vmatprep.subr.mxu0 0.0
    %469 = vmatpush1.msra.mxu0 0.0
    %470 = vmatprep.subr.mxu0 0.0
    %471 = vmatpush1.msra.mxu0 0.0
    %472 = vmatprep.mubr.f32.mxu0 0.0
    %473 = vmatmul.mubr.f32.gmra.mrb[0].mxu0 %v361
    %v474 = vpop.f32.mrb[0].mxu0
    %v475 = vadd.f32 %v282, %v474
    %v476 = vpop.f32.mrb[0].mxu0
    %477 = vmatprep.mubr.f32.mxu0 0.0
    %478 = vmatmul.mubr.f32.gmra.mrb[0].mxu0 %v364
    %v479 = vpop.f32.mrb[0].mxu0
    %v480 = vadd.f32 %v287, %v479
    %v481 = vpop.f32.mrb[0].mxu0
    %482 = vmatprep.mubr.f32.mxu0 0.0
    %483 = vmatmul.mubr.f32.gmra.mrb[0].mxu0 %v367
    %v484 = vpop.f32.mrb[0].mxu0
    %v485 = vadd.f32 %v292, %v484
    %v486 = vpop.f32.mrb[0].mxu0
    %487 = vmatprep.mubr.f32.mxu0 0.0
    %488 = vmatmul.mubr.f32.gmra.mrb[0].mxu0 %v370
    %v489 = vpop.f32.mrb[0].mxu0
    %v490 = vadd.f32 %v297, %v489
    %v491 = vpop.f32.mrb[0].mxu0
    %492 = vmatprep.mubr.f32.mxu0 0.0
    %493 = vmatmul.mubr.f32.gmra.mrb[0].mxu0 %v373
    %v494 = vpop.f32.mrb[0].mxu0
    %v495 = vadd.f32 %v302, %v494
    %v496 = vpop.f32.mrb[0].mxu0
    %497 = vmatprep.mubr.f32.mxu0 0.0
    %498 = vmatmul.mubr.f32.gmra.mrb[0].mxu0 %v376
    %v499 = vpop.f32.mrb[0].mxu0
    %v500 = vadd.f32 %v307, %v499
    %v501 = vpop.f32.mrb[0].mxu0
    %502 = vmatprep.mubr.f32.mxu0 0.0
    %503 = vmatmul.mubr.f32.gmra.mrb[0].mxu0 %v379
    %v504 = vpop.f32.mrb[0].mxu0
    %v505 = vadd.f32 %v312, %v504
    %v506 = vpop.f32.mrb[0].mxu0
    %507 = vmatprep.mubr.f32.mxu0 0.0
    %508 = vmatmul.mubr.f32.gmra.mrb[0].mxu0 %v382
    %v509 = vpop.f32.mrb[0].mxu0
    %v510 = vadd.f32 %v317, %v509
    %v511 = vpop.f32.mrb[0].mxu0
    %512 = vmatprep.mubr.f32.mxu0 0.0
    %513 = vmatmul.mubr.f32.gmra.mrb[0].mxu0 %v385
    %v514 = vpop.f32.mrb[0].mxu0
    %v515 = vadd.f32 %v322, %v514
    %v516 = vpop.f32.mrb[0].mxu0
    %517 = vmatprep.mubr.f32.mxu0 0.0
    %518 = vmatmul.mubr.f32.gmra.mrb[0].mxu0 %v388
    %v519 = vpop.f32.mrb[0].mxu0
    %v520 = vadd.f32 %v327, %v519
    %v521 = vpop.f32.mrb[0].mxu0
    %522 = vmatprep.mubr.f32.mxu0 0.0
    %523 = vmatmul.mubr.f32.gmra.mrb[0].mxu0 %v391
    %v524 = vpop.f32.mrb[0].mxu0
    %v525 = vadd.f32 %v332, %v524
    %v526 = vpop.f32.mrb[0].mxu0
    %527 = vmatprep.mubr.f32.mxu0 0.0
    %528 = vmatmul.mubr.f32.gmra.mrb[0].mxu0 %v394
    %v529 = vpop.f32.mrb[0].mxu0
    %v530 = vadd.f32 %v337, %v529
    %v531 = vpop.f32.mrb[0].mxu0
    %532 = vmatprep.mubr.f32.mxu0 0.0
    %533 = vmatmul.mubr.f32.gmra.mrb[0].mxu0 %v397
    %v534 = vpop.f32.mrb[0].mxu0
    %v535 = vadd.f32 %v342, %v534
    %v536 = vpop.f32.mrb[0].mxu0
    %537 = vmatprep.mubr.f32.mxu0 0.0
    %538 = vmatmul.mubr.f32.gmra.mrb[0].mxu0 %v400
    %v539 = vpop.f32.mrb[0].mxu0
    %v540 = vadd.f32 %v347, %v539
    %v541 = vpop.f32.mrb[0].mxu0
    %542 = vmatprep.mubr.f32.mxu0 0.0
    %543 = vmatmul.mubr.f32.gmra.mrb[0].mxu0 %v403
    %v544 = vpop.f32.mrb[0].mxu0
    %v545 = vadd.f32 %v352, %v544
    %v546 = vpop.f32.mrb[0].mxu0
    %547 = vmatprep.mubr.f32.mxu0 0.0
    %548 = vmatmul.mubr.f32.gmra.mrb[0].mxu0 %v406
    %v549 = vpop.f32.mrb[0].mxu0
    %v550 = vadd.f32 %v357, %v549
    %v551 = vpop.f32.mrb[0].mxu0
    %552 = vdwg.mxu0
    %v553 = vsel %vm359, %v475, inf
    %v554 = vsel %vm359, %v480, inf
    %v555 = vsel %vm359, %v485, inf
    %v556 = vsel %vm359, %v490, inf
    %v557 = vsel %vm359, %v495, inf
    %v558 = vmin.f32 %v553, %v557
    %v559 = vsel %vm359, %v500, inf
    %v560 = vmin.f32 %v554, %v559
    %v561 = vsel %vm359, %v505, inf
    %v562 = vmin.f32 %v555, %v561
    %v563 = vsel %vm359, %v510, inf
    %v564 = vmin.f32 %v556, %v563
    %v565 = vsel %vm359, %v515, inf
    %v566 = vmin.f32 %v558, %v565
    %v567 = vsel %vm359, %v520, inf
    %v568 = vmin.f32 %v560, %v567
    %v569 = vsel %vm359, %v525, inf
    %v570 = vmin.f32 %v562, %v569
    %v571 = vsel %vm359, %v530, inf
    %v572 = vmin.f32 %v564, %v571
    %v573 = vsel %vm359, %v535, inf
    %v574 = vmin.f32 %v566, %v573
    %v575 = vsel %vm359, %v540, inf
    %v576 = vmin.f32 %v568, %v575
    %v577 = vsel %vm359, %v545, inf
    %v578 = vmin.f32 %v570, %v577
    %v579 = vsel %vm359, %v550, inf
    %v580 = vmin.f32 %v572, %v579
    %v581 = vmin.f32 %v574, %v576
    %v582 = vmin.f32 %v578, %v580
    %v583 = vmin.f32 %v581, %v582
    %v584 = vrot.slane %v583, 4
    %v585 = vmin.f32 %v583, %v584
    %v586 = vrot.slane %v585, 2
    %v587 = vmin.f32 %v585, %v586
    %v588 = vrot.slane %v587, 1
    %v589 = vmin.f32 %v587, %v588
    %v590 = vlaneseq
    %v591 = vshrl.u32 %v590, 7
    %v592 = vadd.s32 %v591, 8
    %v593 = vadd.s32 %v591, 16
    %v594 = vadd.s32 %v591, 24
    %v595 = vadd.s32 %v591, 32
    %v596 = vadd.s32 %v591, 40
    %v597 = vadd.s32 %v591, 48
    %v598 = vadd.s32 %v591, 56
    %v599 = vadd.s32 %v591, 64
    %v600 = vadd.s32 %v591, 72
    %v601 = vadd.s32 %v591, 80
    %v602 = vadd.s32 %v591, 88
    %v603 = vadd.s32 %v591, 96
    %v604 = vadd.s32 %v591, 104
    %v605 = vadd.s32 %v591, 112
    %v606 = vadd.s32 %v591, 120
    %vm607 = vcmp.le.f32.partialorder %v475, %v589
    %vm608 = vcmp.le.f32.partialorder %v480, %v589
    %vm609 = vcmp.le.f32.partialorder %v485, %v589
    %vm610 = vcmp.le.f32.partialorder %v490, %v589
    %vm611 = vcmp.le.f32.partialorder %v495, %v589
    %vm612 = vcmp.le.f32.partialorder %v500, %v589
    %vm613 = vcmp.le.f32.partialorder %v505, %v589
    %vm614 = vcmp.le.f32.partialorder %v510, %v589
    %vm615 = vcmp.le.f32.partialorder %v515, %v589
    %vm616 = vcmp.le.f32.partialorder %v520, %v589
    %vm617 = vcmp.le.f32.partialorder %v525, %v589
    %vm618 = vcmp.le.f32.partialorder %v530, %v589
    %vm619 = vcmp.le.f32.partialorder %v535, %v589
    %vm620 = vcmp.le.f32.partialorder %v540, %v589
    %vm621 = vcmp.le.f32.partialorder %v545, %v589
    %vm622 = vcmp.le.f32.partialorder %v550, %v589
    %v623 = vsel %vm607, %v591, 128
    %v624 = vsel %vm608, %v592, 128
    %v625 = vsel %vm609, %v593, 128
    %v626 = vsel %vm610, %v594, 128
    %v627 = vsel %vm611, %v595, 128
    %v628 = vsel %vm612, %v596, 128
    %v629 = vsel %vm613, %v597, 128
    %v630 = vsel %vm614, %v598, 128
    %v631 = vsel %vm615, %v599, 128
    %v632 = vsel %vm616, %v600, 128
    %v633 = vsel %vm617, %v601, 128
    %v634 = vsel %vm618, %v602, 128
    %v635 = vsel %vm619, %v603, 128
    %v636 = vsel %vm620, %v604, 128
    %v637 = vsel %vm621, %v605, 128
    %v638 = vsel %vm622, %v606, 128
    %v639 = vsel %vm359, %v623, 2147483647
    %v640 = vsel %vm359, %v624, 2147483647
    %v641 = vsel %vm359, %v625, 2147483647
    %v642 = vsel %vm359, %v626, 2147483647
    %v643 = vsel %vm359, %v627, 2147483647
    %vm644 = vcmp.lt.s32.totalorder %v639, %v643
    %v645 = vsel %vm644, %v639, %v643
    %v646 = vsel %vm359, %v628, 2147483647
    %vm647 = vcmp.lt.s32.totalorder %v640, %v646
    %v648 = vsel %vm647, %v640, %v646
    %v649 = vsel %vm359, %v629, 2147483647
    %vm650 = vcmp.lt.s32.totalorder %v641, %v649
    %v651 = vsel %vm650, %v641, %v649
    %v652 = vsel %vm359, %v630, 2147483647
    %vm653 = vcmp.lt.s32.totalorder %v642, %v652
    %v654 = vsel %vm653, %v642, %v652
    %v655 = vsel %vm359, %v631, 2147483647
    %vm656 = vcmp.lt.s32.totalorder %v645, %v655
    %v657 = vsel %vm656, %v645, %v655
    %v658 = vsel %vm359, %v632, 2147483647
    %vm659 = vcmp.lt.s32.totalorder %v648, %v658
    %v660 = vsel %vm659, %v648, %v658
    %v661 = vsel %vm359, %v633, 2147483647
    %vm662 = vcmp.lt.s32.totalorder %v651, %v661
    %v663 = vsel %vm662, %v651, %v661
    %v664 = vsel %vm359, %v634, 2147483647
    %vm665 = vcmp.lt.s32.totalorder %v654, %v664
    %v666 = vsel %vm665, %v654, %v664
    %v667 = vsel %vm359, %v635, 2147483647
    %vm668 = vcmp.lt.s32.totalorder %v657, %v667
    %v669 = vsel %vm668, %v657, %v667
    %v670 = vsel %vm359, %v636, 2147483647
    %vm671 = vcmp.lt.s32.totalorder %v660, %v670
    %v672 = vsel %vm671, %v660, %v670
    %v673 = vsel %vm359, %v637, 2147483647
    %vm674 = vcmp.lt.s32.totalorder %v663, %v673
    %v675 = vsel %vm674, %v663, %v673
    %v676 = vsel %vm359, %v638, 2147483647
    %vm677 = vcmp.lt.s32.totalorder %v666, %v676
    %v678 = vsel %vm677, %v666, %v676
    %vm679 = vcmp.lt.s32.totalorder %v669, %v672
    %v680 = vsel %vm679, %v669, %v672
    %vm681 = vcmp.lt.s32.totalorder %v675, %v678
    %v682 = vsel %vm681, %v675, %v678
    %vm683 = vcmp.lt.s32.totalorder %v680, %v682
    %v684 = vsel %vm683, %v680, %v682
    %v685 = vrot.slane %v684, 4
    %vm686 = vcmp.lt.s32.totalorder %v684, %v685
    %v687 = vsel %vm686, %v684, %v685
    %v688 = vrot.slane %v687, 2
    %vm689 = vcmp.lt.s32.totalorder %v687, %v688
    %v690 = vsel %vm689, %v687, %v688
    %v691 = vrot.slane %v690, 1
    %vm692 = vcmp.lt.s32.totalorder %v690, %v691
    %v693 = vsel %vm692, %v690, %v691
    %vm694 = vcmask 516096
    %695 = vst.msk [vmem:[#allocation2] sm:$0x1] %vm694, %v693
    // Predicated region
    $region22: #{tpu_custom_call.1} parent=1 // pred_check
      _
    $region23: #{tpu_custom_call.1} parent=1 // pred_check_branch
      %697 = sbr.rel (0) target = $region25
    $region24: #{tpu_custom_call.1} parent=1 // pred_region
      %s699 = ssub.s32 16, 16
      %700 = vsyncadd [#allocation3], %s699
      %s702 = sshll.u32 [#allocation2], 4
      %s703 = int_to_ptr.vmem [resolvable:$true] %s702
      %705 = dma.vmem_to_hbm [thread:$0]  %s703, 16, %s5, [#allocation3]
    $region25: #{tpu_custom_call.1} parent=1 // pred_fallthru
      _
    // Predicated region
    $region26: #{tpu_custom_call.1} parent=1 // pred_check
      _
    $region27: #{tpu_custom_call.1} parent=1 // pred_check_branch
      %707 = sbr.rel (0) target = $region29
    $region28: #{tpu_custom_call.1} parent=1 // pred_region
      %708 = dma.done [#allocation3], 16
    $region29: #{tpu_custom_call.1} parent=1 // pred_fallthru
      _
    %709 = vsyncpa [#allocation3], 1

</llo_original>
